<compile_context>
chip_gen: v7x
topology: tpu7x:2x2x1
jax: 0.10.0
libtpu: 0.0.40
codegen_flags: <defaults>
</compile_context>

<pallas_src>
import jax
import jax.numpy as jnp
from jax.experimental import pallas as pl
from jax.experimental.pallas import tpu as pltpu


_SEM = ("parallel", "parallel", "arbitrary")
_VMEM_LIMIT = 32 * 1024 * 1024   # explicit scoped-VMEM budget (v5e default is 16 MiB)


# --------------------------------------------------------------------------
# Stage 0 (theta): XT = X @ W + b        grid = (N/tN, Cout/tC, Cin/tK)
# --------------------------------------------------------------------------
def _theta_kernel(x_ref, w_ref, b_ref, xt_ref, acc_ref):
    k = pl.program_id(2)

    @pl.when(k == 0)
    def _init():
        acc_ref[...] = jnp.zeros_like(acc_ref)

    # bf16 x bf16 -> f32 accumulate on the MXU
    acc_ref[...] += jnp.dot(x_ref[...], w_ref[...],
                            preferred_element_type=jnp.float32)

    @pl.when(k == pl.num_programs(2) - 1)
    def _finalize():
        xt_ref[...] = (acc_ref[...] + b_ref[...]).astype(xt_ref.dtype)


# --------------------------------------------------------------------------
# Stage A (v2e): Y = D_e^{-1} * (H^T @ XT)     grid = (E/tE, Cout/tC, N/tN)
# --------------------------------------------------------------------------
def _v2e_kernel(ht_ref, xt_ref, inv_e_ref, y_ref, acc_ref):
    n = pl.program_id(2)

    @pl.when(n == 0)
    def _init():
        acc_ref[...] = jnp.zeros_like(acc_ref)

    # H^T is pre-transposed outside the kernel -> plain MXU-native matmul here.
    acc_ref[...] += jnp.dot(ht_ref[...], xt_ref[...],
                            preferred_element_type=jnp.float32)

    @pl.when(n == pl.num_programs(2) - 1)
    def _finalize():
        y_ref[...] = (acc_ref[...] * inv_e_ref[...]).astype(y_ref.dtype)


# --------------------------------------------------------------------------
# Stage B (e2v + act): X_ = relu(D_v^{-1} * (H @ Y))   grid = (N/tN, Cout/tC, E/tE)
# --------------------------------------------------------------------------
def _e2v_relu_kernel(h_ref, y_ref, inv_v_ref, o_ref, acc_ref):
    e = pl.program_id(2)

    @pl.when(e == 0)
    def _init():
        acc_ref[...] = jnp.zeros_like(acc_ref)

    acc_ref[...] += jnp.dot(h_ref[...], y_ref[...],
                            preferred_element_type=jnp.float32)

    @pl.when(e == pl.num_programs(2) - 1)
    def _finalize():
        # act (ReLU) + drop (identity, drop_rate=0).
        # TODO(synk): drop_rate > 0 (training mode) would need pltpu.prng_* masking.
        o_ref[...] = jnp.maximum(acc_ref[...] * inv_v_ref[...], 0.0).astype(o_ref.dtype)


# --------------------------------------------------------------------------
# Wrapper
# --------------------------------------------------------------------------
def _round_up(x, m):
    return ((x + m - 1) // m) * m


def _choose_tile(dim, max_tile):
    tile = min(_round_up(dim, 128), max_tile)
    return tile, _round_up(dim, tile)


def hgnnp_conv(X, W_t, b, H):
    """X: (N, Cin) f32, W_t: (Cin, Cout) f32 (== torch weight.T), b: (Cout,) f32,
    H: (N, E) dense 0/1 incidence matrix."""
    N, Cin = X.shape
    Cout = W_t.shape[1]
    E = H.shape[1]

    # 512-wide streaming/reduction tiles (~85% of HBM roofline vs ~63% at 256);
    # Cout kept fully resident up to 1024 so H / H^T are streamed once per stage.
    tN, N_p = _choose_tile(N, 512)
    tE, E_p = _choose_tile(E, 512)
    tC, C_p = _choose_tile(Cout, 1024)
    tK, K_p = _choose_tile(Cin, 512)

    Xf = jnp.pad(jnp.asarray(X, jnp.float32), ((0, N_p - N), (0, K_p - Cin)))
    Wf = jnp.pad(jnp.asarray(W_t, jnp.float32), ((0, K_p - Cin), (0, C_p - Cout)))
    b_p = jnp.pad(jnp.asarray(b, jnp.float32), (0, C_p - Cout)).reshape(1, C_p)
    H_p = jnp.pad(jnp.asarray(H, jnp.float32), ((0, N_p - N), (0, E_p - E)))

    # Inverse degrees from the ORIGINAL H orientation, precomputed once
    # (inf-free: reciprocal of max(deg,1), masked to 0 for empty edges / isolated vertices).
    deg_e = jnp.sum(H_p, axis=0)
    inv_e = jnp.where(deg_e > 0, 1.0 / jnp.maximum(deg_e, 1.0), 0.0).reshape(E_p, 1)
    deg_v = jnp.sum(H_p, axis=1)
    inv_v = jnp.where(deg_v > 0, 1.0 / jnp.maximum(deg_v, 1.0), 0.0).reshape(N_p, 1)

    # bf16 operands (0/1 incidence is exact in bf16) -> native-rate MXU matmuls,
    # half the HBM/VMEM bytes; accumulation stays f32 in-kernel.
    X_bf = Xf.astype(jnp.bfloat16)
    W_bf = Wf.astype(jnp.bfloat16)
    H_bf = H_p.astype(jnp.bfloat16)                       # (N_p, E_p)  for e2v
    HT_bf = jnp.transpose(H_p).astype(jnp.bfloat16)       # (E_p, N_p)  one-time transpose for v2e

    cp = pltpu.CompilerParams(dimension_semantics=_SEM,
                              vmem_limit_bytes=_VMEM_LIMIT)

    # ---- Stage 0: XT = X @ W + b  (theta, computed exactly once) ----------
    xt = pl.pallas_call(
        _theta_kernel,
        out_shape=jax.ShapeDtypeStruct((N_p, C_p), jnp.bfloat16),
        grid_spec=pltpu.PrefetchScalarGridSpec(
            num_scalar_prefetch=0,
            grid=(N_p // tN, C_p // tC, K_p // tK),
            in_specs=[
                pl.BlockSpec((tN, tK), lambda n, c, k: (n, k)),   # X tile (bf16)
                pl.BlockSpec((tK, tC), lambda n, c, k: (k, c)),   # W tile (bf16)
                pl.BlockSpec((1, tC),  lambda n, c, k: (0, c)),   # bias (f32)
            ],
            out_specs=pl.BlockSpec((tN, tC), lambda n, c, k: (n, c)),
            scratch_shapes=[pltpu.VMEM((tN, tC), jnp.float32)],
        ),
        compiler_params=cp,
    )(X_bf, W_bf, b_p)

    # ---- Stage A: Y = D_e^{-1} H^T XT --------------------------------------
    y = pl.pallas_call(
        _v2e_kernel,
        out_shape=jax.ShapeDtypeStruct((E_p, C_p), jnp.bfloat16),
        grid_spec=pltpu.PrefetchScalarGridSpec(
            num_scalar_prefetch=0,
            grid=(E_p // tE, C_p // tC, N_p // tN),
            in_specs=[
                pl.BlockSpec((tE, tN), lambda e, c, n: (e, n)),   # H^T tile (bf16)
                pl.BlockSpec((tN, tC), lambda e, c, n: (n, c)),   # XT tile (bf16)
                pl.BlockSpec((tE, 1),  lambda e, c, n: (e, 0)),   # D_e^{-1}
            ],
            out_specs=pl.BlockSpec((tE, tC), lambda e, c, n: (e, c)),
            scratch_shapes=[pltpu.VMEM((tE, tC), jnp.float32)],
        ),
        compiler_params=cp,
    )(HT_bf, xt, inv_e)

    # ---- Stage B: out = relu(D_v^{-1} H Y) ----------------------------------
    out_p = pl.pallas_call(
        _e2v_relu_kernel,
        out_shape=jax.ShapeDtypeStruct((N_p, C_p), jnp.float32),
        grid_spec=pltpu.PrefetchScalarGridSpec(
            num_scalar_prefetch=0,
            grid=(N_p // tN, C_p // tC, E_p // tE),
            in_specs=[
                pl.BlockSpec((tN, tE), lambda v, c, e: (v, e)),   # H tile (bf16)
                pl.BlockSpec((tE, tC), lambda v, c, e: (e, c)),   # Y tile (bf16)
                pl.BlockSpec((tN, 1),  lambda v, c, e: (v, 0)),   # D_v^{-1}
            ],
            out_specs=pl.BlockSpec((tN, tC), lambda v, c, e: (v, c)),
            scratch_shapes=[pltpu.VMEM((tN, tC), jnp.float32)],
        ),
        compiler_params=cp,
    )(H_bf, y, inv_v)

    return out_p[:N, :Cout]


# --------------------------------------------------------------------------
# Pure-JAX f32 reference
# --------------------------------------------------------------------------
def reference(X, W_t, b, H):
    xt = X @ W_t + b[None, :]
    deg_e = H.sum(axis=0)[:, None]
    y = jnp.where(deg_e > 0, (H.T @ xt) / jnp.maximum(deg_e, 1.0), 0.0)
    deg_v = H.sum(axis=1)[:, None]
    xv = jnp.where(deg_v > 0, (H @ y) / jnp.maximum(deg_v, 1.0), 0.0)
    return jnp.maximum(xv, 0.0)


if __name__ == "__main__":
    # Small deterministic problem: 16 vertices, 8 hyperedges, 32 -> 32 features.
    N, E, C_IN, C_OUT = 16, 8, 32, 32
    key = jax.random.PRNGKey(0)
    kx, kh, kw, kb = jax.random.split(key, 4)

    X = jax.random.normal(kx, (N, C_IN), dtype=jnp.float32)

    # Synthetic binary incidence matrix; guarantee every hyperedge has >= 1 vertex.
    H = (jax.random.uniform(kh, (N, E)) < 0.35).astype(jnp.float32)
    for e in range(E):
        H = H.at[e % N, e].set(1.0)

    # Deterministic Linear params (PyTorch-default uniform bound 1/sqrt(in_channels)).
    bound = 1.0 / (C_IN ** 0.5)
    W_t = jax.random.uniform(kw, (C_IN, C_OUT), minval=-bound, maxval=bound,
                             dtype=jnp.float32)     # already (in, out) = weight.T
    b = jax.random.uniform(kb, (C_OUT,), minval=-bound, maxval=bound,
                           dtype=jnp.float32)

    out = hgnnp_conv(X, W_t, b, H)
    out = jax.block_until_ready(out)

    ref = reference(X, W_t, b, H)
    assert out.shape == (N, C_OUT)
    # X/W/H matmuls run in bf16 (f32 accumulation), so compare with a bf16-level tolerance.
    assert jnp.allclose(out, ref, atol=2e-2, rtol=2e-2), float(jnp.max(jnp.abs(out - ref)))

    print("KERNEL_OK")
</pallas_src>

<mosaic_0001>
module attributes {stable_mosaic.version = 11 : i64} {
  func.func @_theta_kernel(%arg0: i32, %arg1: i32, %arg2: i32, %arg3: memref<128x128xbf16, #tpu.memory_space<vmem>>, %arg4: memref<128x128xbf16, #tpu.memory_space<vmem>>, %arg5: memref<1x128xf32, #tpu.memory_space<vmem>>, %arg6: memref<128x128xbf16, #tpu.memory_space<vmem>>, %arg7: memref<128x128xf32, #tpu.memory_space<vmem>>) attributes {dimension_semantics = [#tpu.dimension_semantics<parallel>, #tpu.dimension_semantics<parallel>, #tpu.dimension_semantics<arbitrary>], iteration_bounds = array<i64: 1, 1, 1>, scalar_prefetch = 0 : i64, scratch_operands = 1 : i64, tpu.core_type = #tpu.core_type<tc>, window_params = [{transform_indices = @transform_0, window_bounds = array<i64: 128, 128>}, {transform_indices = @transform_1, window_bounds = array<i64: 128, 128>}, {transform_indices = @transform_2, window_bounds = array<i64: 1, 128>}, {transform_indices = @transform_3, window_bounds = array<i64: 128, 128>}]} {
    %c0_i32 = arith.constant 0 : i32
    %0 = arith.cmpi eq, %arg2, %c0_i32 : i32
    %1 = arith.extui %0 : i1 to i32
    %c0_i32_0 = arith.constant 0 : i32
    %2 = arith.cmpi ne, %1, %c0_i32_0 : i32
    scf.if %2 {
      %cst_10 = arith.constant 0.000000e+00 : f32
      %12 = vector.broadcast %cst_10 : f32 to vector<128x128xf32>
      %c0_11 = arith.constant 0 : index
      %c0_12 = arith.constant 0 : index
      %13 = vector.load %arg7[%c0_11, %c0_12] : memref<128x128xf32, #tpu.memory_space<vmem>>, vector<128x128xf32>
      tpu.vector_store %arg7[%c0_11, %c0_12], %12 {strides = array<i32>} : memref<128x128xf32, #tpu.memory_space<vmem>>, vector<128x128xf32>,
    } else {
    }
    %c0 = arith.constant 0 : index
    %c0_1 = arith.constant 0 : index
    %3 = vector.load %arg7[%c0, %c0_1] : memref<128x128xf32, #tpu.memory_space<vmem>>, vector<128x128xf32>
    %c0_2 = arith.constant 0 : index
    %c0_3 = arith.constant 0 : index
    %4 = vector.load %arg3[%c0_2, %c0_3] : memref<128x128xbf16, #tpu.memory_space<vmem>>, vector<128x128xbf16>
    %c0_4 = arith.constant 0 : index
    %c0_5 = arith.constant 0 : index
    %5 = vector.load %arg4[%c0_4, %c0_5] : memref<128x128xbf16, #tpu.memory_space<vmem>>, vector<128x128xbf16>
    %cst = arith.constant dense<0.000000e+00> : vector<128x128xf32>
    %6 = tpu.matmul %4, %5, %cst {dimension_numbers = #tpu.dot_dimension_numbers<[1], [0], [0], [1], [0, 0, 1, 1], [], []>} : vector<128x128xbf16>, vector<128x128xbf16>, vector<128x128xf32> -> vector<128x128xf32>
    %7 = arith.addf %3, %6 : vector<128x128xf32>
    %c0_6 = arith.constant 0 : index
    %c0_7 = arith.constant 0 : index
    %8 = vector.load %arg7[%c0_6, %c0_7] : memref<128x128xf32, #tpu.memory_space<vmem>>, vector<128x128xf32>
    tpu.vector_store %arg7[%c0_6, %c0_7], %7 {strides = array<i32>} : memref<128x128xf32, #tpu.memory_space<vmem>>, vector<128x128xf32>,
    %c0_i32_8 = arith.constant 0 : i32
    %9 = arith.cmpi eq, %arg2, %c0_i32_8 : i32
    %10 = arith.extui %9 : i1 to i32
    %c0_i32_9 = arith.constant 0 : i32
    %11 = arith.cmpi ne, %10, %c0_i32_9 : i32
    scf.if %11 {
      %c0_10 = arith.constant 0 : index
      %c0_11 = arith.constant 0 : index
      %12 = vector.load %arg7[%c0_10, %c0_11] : memref<128x128xf32, #tpu.memory_space<vmem>>, vector<128x128xf32>
      %c0_12 = arith.constant 0 : index
      %c0_13 = arith.constant 0 : index
      %13 = vector.load %arg5[%c0_12, %c0_13] : memref<1x128xf32, #tpu.memory_space<vmem>>, vector<1x128xf32>
      %14 = vector.broadcast %13 : vector<1x128xf32> to vector<128x128xf32>
      %15 = arith.addf %12, %14 : vector<128x128xf32>
      %16 = arith.truncf %15 : vector<128x128xf32> to vector<128x128xbf16>
      %c0_14 = arith.constant 0 : index
      %c0_15 = arith.constant 0 : index
      %17 = vector.load %arg6[%c0_14, %c0_15] : memref<128x128xbf16, #tpu.memory_space<vmem>>, vector<128x128xbf16>
      tpu.vector_store %arg6[%c0_14, %c0_15], %16 {strides = array<i32>} : memref<128x128xbf16, #tpu.memory_space<vmem>>, vector<128x128xbf16>,
    } else {
    }
    return
  }
  func.func @transform_0(%arg0: i32, %arg1: i32, %arg2: i32) -> (i32, i32) {
    %c0_i32 = arith.constant 0 : i32
    return %arg0, %arg2 : i32, i32
  }
  func.func @transform_1(%arg0: i32, %arg1: i32, %arg2: i32) -> (i32, i32) {
    %c0_i32 = arith.constant 0 : i32
    return %arg2, %arg1 : i32, i32
  }
  func.func @transform_2(%arg0: i32, %arg1: i32, %arg2: i32) -> (i32, i32) {
    %c0_i32 = arith.constant 0 : i32
    %c0_i32_0 = arith.constant 0 : i32
    return %c0_i32, %arg1 : i32, i32
  }
  func.func @transform_3(%arg0: i32, %arg1: i32, %arg2: i32) -> (i32, i32) {
    %c0_i32 = arith.constant 0 : i32
    return %arg0, %arg1 : i32, i32
  }
}

</mosaic_0001>

<llo_original>
// kernel: tpu_custom_call.1
$region0: #{tpu_custom_call.1}
  #allocation0 [shape = 'u32[]', space=smem, size = 0x4, offset = 0x4, fixed_abs, tag = 'smem constant byte address 0x4 - core index']
  #allocation1 [shape = 'u32[144,128]{1,0:T(1,128)}', space=vmem, size = 0x12000, scoped, tag = 'internal scratch']
  #allocation2 [shape = 'f32[128,128]{1,0:T(8,128)}', space=vmem, size = 0x10000, scoped, tag = 'scratch operand']
  %s0 = inlined_call_operand.hbm [shape: bf16[128,128], index: 0, kind: input, shape index: {}]
  %s1 = inlined_call_operand.hbm [shape: bf16[128,128], index: 1, kind: input, shape index: {}]
  %s2 = inlined_call_operand.vmem [shape: f32[1,128], index: 2, kind: input, shape index: {}]
  %s3 = inlined_call_operand.hbm [shape: bf16[128,128], index: 3, kind: output, shape index: {}]
  %s4 = sld [smem:[#allocation0]]
  $region38: #{tpu_custom_call.1} parent=0
    _
  %s6 = ssub.s32 1, %s4
  %s7 = scalar_select 0, %s6, %s4
  $region1: #{tpu_custom_call.1} parent=0
    #allocation3 [shape = 'u8[32768]{0}', space=vmem, size = 0x8000, scoped, tag = 'input window, operand 0, single buffered']
    #allocation4 [shape = 's32[1]{0}', space=sflag, size = 0x4, scoped, tag = 'scoped memory for tpu_custom_call.1']
    #allocation5 [shape = 's32[1]{0}', space=sflag, size = 0x4, scoped, tag = 'scoped memory for tpu_custom_call.1']
    #allocation6 [shape = 'u8[32768]{0}', space=vmem, size = 0x8000, scoped, tag = 'input window, operand 1, single buffered']
    #allocation7 [shape = 's32[1]{0}', space=sflag, size = 0x4, scoped, tag = 'scoped memory for tpu_custom_call.1']
    #allocation8 [shape = 'u8[32768]{0}', space=vmem, size = 0x8000, scoped, tag = 'output window, operand 0, single buffered']
    %8 = vsyncpa [#allocation4], 0
    %9 = vsyncpa [#allocation7], 0
    %10 = vsyncpa [#allocation5], 0
    // Predicated region
    $region2: #{tpu_custom_call.1} parent=1 // pred_check
      _
    $region3: #{tpu_custom_call.1} parent=1 // pred_check_branch
      %12 = sbr.rel (0) target = $region5
    $region4: #{tpu_custom_call.1} parent=1 // pred_region
      %s14 = ssub.s32 1024, 1024
      %15 = vsyncadd [#allocation4], %s14
      %s16 = sshll.u32 [#allocation3], 4
      %s17 = int_to_ptr.vmem [resolvable:$true] %s16
      %22 = dma.hbm_to_vmem [thread:$0]  %s0, 1024, %s17, [#allocation4], 64, 64, 4
    $region5: #{tpu_custom_call.1} parent=1 // pred_fallthru
      _
    // Predicated region
    $region6: #{tpu_custom_call.1} parent=1 // pred_check
      _
    $region7: #{tpu_custom_call.1} parent=1 // pred_check_branch
      %24 = sbr.rel (0) target = $region9
    $region8: #{tpu_custom_call.1} parent=1 // pred_region
      %s26 = ssub.s32 1024, 1024
      %27 = vsyncadd [#allocation7], %s26
      %s28 = sshll.u32 [#allocation6], 4
      %s29 = int_to_ptr.vmem [resolvable:$true] %s28
      %34 = dma.hbm_to_vmem [thread:$0]  %s1, 1024, %s29, [#allocation7], 64, 64, 4
    $region9: #{tpu_custom_call.1} parent=1 // pred_fallthru
      _
    // Predicated region
    $region10: #{tpu_custom_call.1} parent=1 // pred_check
      _
    $region11: #{tpu_custom_call.1} parent=1 // pred_check_branch
      %36 = sbr.rel (0) target = $region13
    $region12: #{tpu_custom_call.1} parent=1 // pred_region
      _
    $region13: #{tpu_custom_call.1} parent=1 // pred_fallthru
      _
    // Predicated region
    $region14: #{tpu_custom_call.1} parent=1 // pred_check
      _
    $region15: #{tpu_custom_call.1} parent=1 // pred_check_branch
      %38 = sbr.rel (0) target = $region17
    $region16: #{tpu_custom_call.1} parent=1 // pred_region
      %39 = dma.done [#allocation4], 1024
    $region17: #{tpu_custom_call.1} parent=1 // pred_fallthru
      _
    // Predicated region
    $region18: #{tpu_custom_call.1} parent=1 // pred_check
      _
    $region19: #{tpu_custom_call.1} parent=1 // pred_check_branch
      %41 = sbr.rel (0) target = $region21
    $region20: #{tpu_custom_call.1} parent=1 // pred_region
      %42 = dma.done [#allocation7], 1024
    $region21: #{tpu_custom_call.1} parent=1 // pred_fallthru
      _
    %p44 = scmp.eq.s32.totalorder 0, 0
    // Predicated region
    $region22: #{tpu_custom_call.1} parent=1 // pred_check
      %p45 = pneg %p44
    $region23: #{tpu_custom_call.1} parent=1 // pred_check_branch
      %47 = sbr.rel (%p45) target = $region25
    $region24: #{tpu_custom_call.1} parent=1 // pred_region
      %48 = vst [vmem:[#allocation2] sm:$0xff] 0.0
      %49 = vst [vmem:[#allocation2 + $0x8] sm:$0xff] 0.0
      %50 = vst [vmem:[#allocation2 + $0x10] sm:$0xff] 0.0
      %51 = vst [vmem:[#allocation2 + $0x18] sm:$0xff] 0.0
      %52 = vst [vmem:[#allocation2 + $0x20] sm:$0xff] 0.0
      %53 = vst [vmem:[#allocation2 + $0x28] sm:$0xff] 0.0
      %54 = vst [vmem:[#allocation2 + $0x30] sm:$0xff] 0.0
      %55 = vst [vmem:[#allocation2 + $0x38] sm:$0xff] 0.0
      %56 = vst [vmem:[#allocation2 + $0x40] sm:$0xff] 0.0
      %57 = vst [vmem:[#allocation2 + $0x48] sm:$0xff] 0.0
      %58 = vst [vmem:[#allocation2 + $0x50] sm:$0xff] 0.0
      %59 = vst [vmem:[#allocation2 + $0x58] sm:$0xff] 0.0
      %60 = vst [vmem:[#allocation2 + $0x60] sm:$0xff] 0.0
      %61 = vst [vmem:[#allocation2 + $0x68] sm:$0xff] 0.0
      %62 = vst [vmem:[#allocation2 + $0x70] sm:$0xff] 0.0
      %63 = vst [vmem:[#allocation2 + $0x78] sm:$0xff] 0.0
    $region25: #{tpu_custom_call.1} parent=1 // pred_fallthru
      _
    %v64 = vld [vmem:[#allocation2] sm:$0xff]
    %v65 = vld [vmem:[#allocation2 + $0x8] sm:$0xff]
    %v66 = vld [vmem:[#allocation2 + $0x10] sm:$0xff]
    %v67 = vld [vmem:[#allocation2 + $0x18] sm:$0xff]
    %v68 = vld [vmem:[#allocation2 + $0x20] sm:$0xff]
    %v69 = vld [vmem:[#allocation2 + $0x28] sm:$0xff]
    %v70 = vld [vmem:[#allocation2 + $0x30] sm:$0xff]
    %v71 = vld [vmem:[#allocation2 + $0x38] sm:$0xff]
    %v72 = vld [vmem:[#allocation2 + $0x40] sm:$0xff]
    %v73 = vld [vmem:[#allocation2 + $0x48] sm:$0xff]
    %v74 = vld [vmem:[#allocation2 + $0x50] sm:$0xff]
    %v75 = vld [vmem:[#allocation2 + $0x58] sm:$0xff]
    %v76 = vld [vmem:[#allocation2 + $0x60] sm:$0xff]
    %v77 = vld [vmem:[#allocation2 + $0x68] sm:$0xff]
    %v78 = vld [vmem:[#allocation2 + $0x70] sm:$0xff]
    %v79 = vld [vmem:[#allocation2 + $0x78] sm:$0xff]
    %v80 = vld [vmem:[#allocation3] sm:$0xf]
    %v81 = vld [vmem:[#allocation3 + $0x4] sm:$0xf]
    %v82 = vld [vmem:[#allocation3 + $0x8] sm:$0xf]
    %v83 = vld [vmem:[#allocation3 + $0xc] sm:$0xf]
    %v84 = vld [vmem:[#allocation3 + $0x10] sm:$0xf]
    %v85 = vld [vmem:[#allocation3 + $0x14] sm:$0xf]
    %v86 = vld [vmem:[#allocation3 + $0x18] sm:$0xf]
    %v87 = vld [vmem:[#allocation3 + $0x1c] sm:$0xf]
    %v88 = vld [vmem:[#allocation3 + $0x20] sm:$0xf]
    %v89 = vld [vmem:[#allocation3 + $0x24] sm:$0xf]
    %v90 = vld [vmem:[#allocation3 + $0x28] sm:$0xf]
    %v91 = vld [vmem:[#allocation3 + $0x2c] sm:$0xf]
    %v92 = vld [vmem:[#allocation3 + $0x30] sm:$0xf]
    %v93 = vld [vmem:[#allocation3 + $0x34] sm:$0xf]
    %v94 = vld [vmem:[#allocation3 + $0x38] sm:$0xf]
    %v95 = vld [vmem:[#allocation3 + $0x3c] sm:$0xf]
    %v96 = vld [vmem:[#allocation6] sm:$0xf]
    %v97 = vld [vmem:[#allocation6 + $0x4] sm:$0xf]
    %v98 = vld [vmem:[#allocation6 + $0x8] sm:$0xf]
    %v99 = vld [vmem:[#allocation6 + $0xc] sm:$0xf]
    %v100 = vld [vmem:[#allocation6 + $0x10] sm:$0xf]
    %v101 = vld [vmem:[#allocation6 + $0x14] sm:$0xf]
    %v102 = vld [vmem:[#allocation6 + $0x18] sm:$0xf]
    %v103 = vld [vmem:[#allocation6 + $0x1c] sm:$0xf]
    %v104 = vld [vmem:[#allocation6 + $0x20] sm:$0xf]
    %v105 = vld [vmem:[#allocation6 + $0x24] sm:$0xf]
    %v106 = vld [vmem:[#allocation6 + $0x28] sm:$0xf]
    %v107 = vld [vmem:[#allocation6 + $0x2c] sm:$0xf]
    %v108 = vld [vmem:[#allocation6 + $0x30] sm:$0xf]
    %v109 = vld [vmem:[#allocation6 + $0x34] sm:$0xf]
    %v110 = vld [vmem:[#allocation6 + $0x38] sm:$0xf]
    %v111 = vld [vmem:[#allocation6 + $0x3c] sm:$0xf]
    %v128 = vunpack.c.l.b16 %v80
    %v129 = vunpack.c.l.b16 %v81
    %v130 = vunpack.c.l.b16 %v82
    %v131 = vunpack.c.l.b16 %v83
    %v132 = vunpack.c.l.b16 %v84
    %v133 = vunpack.c.l.b16 %v85
    %v134 = vunpack.c.l.b16 %v86
    %v135 = vunpack.c.l.b16 %v87
    %v136 = vunpack.c.l.b16 %v88
    %v137 = vunpack.c.l.b16 %v89
    %v138 = vunpack.c.l.b16 %v90
    %v139 = vunpack.c.l.b16 %v91
    %v140 = vunpack.c.l.b16 %v92
    %v141 = vunpack.c.l.b16 %v93
    %v142 = vunpack.c.l.b16 %v94
    %v143 = vunpack.c.l.b16 %v95
    %v144 = vpack.c.b16 %v129, %v128
    %v145 = vpack.c.b16 %v131, %v130
    %v146 = vpack.c.b16 %v133, %v132
    %v147 = vpack.c.b16 %v135, %v134
    %v148 = vpack.c.b16 %v137, %v136
    %v149 = vpack.c.b16 %v139, %v138
    %v150 = vpack.c.b16 %v141, %v140
    %v151 = vpack.c.b16 %v143, %v142
    %v176 = vunpack.c.l.b16 %v96
    %v177 = vunpack.c.l.b16 %v97
    %v178 = vunpack.c.l.b16 %v98
    %v179 = vunpack.c.l.b16 %v99
    %v180 = vunpack.c.l.b16 %v100
    %v181 = vunpack.c.l.b16 %v101
    %v182 = vunpack.c.l.b16 %v102
    %v183 = vunpack.c.l.b16 %v103
    %v184 = vunpack.c.l.b16 %v104
    %v185 = vunpack.c.l.b16 %v105
    %v186 = vunpack.c.l.b16 %v106
    %v187 = vunpack.c.l.b16 %v107
    %v188 = vunpack.c.l.b16 %v108
    %v189 = vunpack.c.l.b16 %v109
    %v190 = vunpack.c.l.b16 %v110
    %v191 = vunpack.c.l.b16 %v111
    %v192 = vpack.c.b16 %v177, %v176
    %v193 = vpack.c.b16 %v179, %v178
    %v194 = vpack.c.b16 %v181, %v180
    %v195 = vpack.c.b16 %v183, %v182
    %v196 = vpack.c.b16 %v185, %v184
    %v197 = vpack.c.b16 %v187, %v186
    %v198 = vpack.c.b16 %v189, %v188
    %v199 = vpack.c.b16 %v191, %v190
    %208 = vmatprep.subr.bf16.mxu0 0
    %209 = vmatpush1.bf16.msra.mxu0 %v192
    %210 = vmatprep.subr.bf16.mxu0 0
    %211 = vmatpush1.bf16.msra.mxu0 %v193
    %212 = vmatprep.subr.bf16.mxu0 0
    %213 = vmatpush1.bf16.msra.mxu0 %v194
    %214 = vmatprep.subr.bf16.mxu0 0
    %215 = vmatpush1.bf16.msra.mxu0 %v195
    %216 = vmatprep.subr.bf16.mxu0 0
    %217 = vmatpush1.bf16.msra.mxu0 %v196
    %218 = vmatprep.subr.bf16.mxu0 0
    %219 = vmatpush1.bf16.msra.mxu0 %v197
    %220 = vmatprep.subr.bf16.mxu0 0
    %221 = vmatpush1.bf16.msra.mxu0 %v198
    %222 = vmatprep.subr.bf16.mxu0 0
    %223 = vmatpush1.bf16.msra.mxu0 %v199
    %224 = vmatprep.subr.bf16.mxu0 0
    %225 = vmatpush1.bf16.msra.mxu0 0
    %226 = vmatprep.subr.bf16.mxu0 0
    %227 = vmatpush1.bf16.msra.mxu0 0
    %228 = vmatprep.subr.bf16.mxu0 0
    %229 = vmatpush1.bf16.msra.mxu0 0
    %230 = vmatprep.subr.bf16.mxu0 0
    %231 = vmatpush1.bf16.msra.mxu0 0
    %232 = vmatprep.subr.bf16.mxu0 0
    %233 = vmatpush1.bf16.msra.mxu0 0
    %234 = vmatprep.subr.bf16.mxu0 0
    %235 = vmatpush1.bf16.msra.mxu0 0
    %236 = vmatprep.subr.bf16.mxu0 0
    %237 = vmatpush1.bf16.msra.mxu0 0
    %238 = vmatprep.subr.bf16.mxu0 0
    %239 = vmatpush1.bf16.msra.mxu0 0
    %240 = vmatprep.mubr.bf16.mxu0 0
    %241 = vmatmul.mubr.bf16.gmra.mrb[0].mxu0 %v144
    %v242 = vpop.f32.mrb[0].mxu0
    %v243 = vadd.f32 0.0, %v242
    %v244 = vpop.f32.mrb[0].mxu0
    %v245 = vpop.f32.mrb[0].mxu0
    %v246 = vadd.f32 0.0, %v245
    %v247 = vpop.f32.mrb[0].mxu0
    %248 = vmatprep.mubr.bf16.mxu0 0
    %249 = vmatmul.mubr.bf16.gmra.mrb[0].mxu0 %v145
    %v250 = vpop.f32.mrb[0].mxu0
    %v251 = vadd.f32 0.0, %v250
    %v252 = vpop.f32.mrb[0].mxu0
    %v253 = vpop.f32.mrb[0].mxu0
    %v254 = vadd.f32 0.0, %v253
    %v255 = vpop.f32.mrb[0].mxu0
    %256 = vmatprep.mubr.bf16.mxu0 0
    %257 = vmatmul.mubr.bf16.gmra.mrb[0].mxu0 %v146
    %v258 = vpop.f32.mrb[0].mxu0
    %v259 = vadd.f32 0.0, %v258
    %v260 = vpop.f32.mrb[0].mxu0
    %v261 = vpop.f32.mrb[0].mxu0
    %v262 = vadd.f32 0.0, %v261
    %v263 = vpop.f32.mrb[0].mxu0
    %264 = vmatprep.mubr.bf16.mxu0 0
    %265 = vmatmul.mubr.bf16.gmra.mrb[0].mxu0 %v147
    %v266 = vpop.f32.mrb[0].mxu0
    %v267 = vadd.f32 0.0, %v266
    %v268 = vpop.f32.mrb[0].mxu0
    %v269 = vpop.f32.mrb[0].mxu0
    %v270 = vadd.f32 0.0, %v269
    %v271 = vpop.f32.mrb[0].mxu0
    %272 = vmatprep.mubr.bf16.mxu0 0
    %273 = vmatmul.mubr.bf16.gmra.mrb[0].mxu0 %v148
    %v274 = vpop.f32.mrb[0].mxu0
    %v275 = vadd.f32 0.0, %v274
    %v276 = vpop.f32.mrb[0].mxu0
    %v277 = vpop.f32.mrb[0].mxu0
    %v278 = vadd.f32 0.0, %v277
    %v279 = vpop.f32.mrb[0].mxu0
    %280 = vmatprep.mubr.bf16.mxu0 0
    %281 = vmatmul.mubr.bf16.gmra.mrb[0].mxu0 %v149
    %v282 = vpop.f32.mrb[0].mxu0
    %v283 = vadd.f32 0.0, %v282
    %v284 = vpop.f32.mrb[0].mxu0
    %v285 = vpop.f32.mrb[0].mxu0
    %v286 = vadd.f32 0.0, %v285
    %v287 = vpop.f32.mrb[0].mxu0
    %288 = vmatprep.mubr.bf16.mxu0 0
    %289 = vmatmul.mubr.bf16.gmra.mrb[0].mxu0 %v150
    %v290 = vpop.f32.mrb[0].mxu0
    %v291 = vadd.f32 0.0, %v290
    %v292 = vpop.f32.mrb[0].mxu0
    %v293 = vpop.f32.mrb[0].mxu0
    %v294 = vadd.f32 0.0, %v293
    %v295 = vpop.f32.mrb[0].mxu0
    %296 = vmatprep.mubr.bf16.mxu0 0
    %297 = vmatmul.mubr.bf16.gmra.mrb[0].mxu0 %v151
    %v298 = vpop.f32.mrb[0].mxu0
    %v299 = vadd.f32 0.0, %v298
    %v300 = vpop.f32.mrb[0].mxu0
    %v301 = vpop.f32.mrb[0].mxu0
    %v302 = vadd.f32 0.0, %v301
    %v303 = vpop.f32.mrb[0].mxu0
    %304 = vdwg.mxu0
    %v305 = vadd.f32 %v64, %v243
    %v306 = vadd.f32 %v65, %v246
    %v307 = vadd.f32 %v66, %v251
    %v308 = vadd.f32 %v67, %v254
    %v309 = vadd.f32 %v68, %v259
    %v310 = vadd.f32 %v69, %v262
    %v311 = vadd.f32 %v70, %v267
    %v312 = vadd.f32 %v71, %v270
    %v313 = vadd.f32 %v72, %v275
    %v314 = vadd.f32 %v73, %v278
    %v315 = vadd.f32 %v74, %v283
    %v316 = vadd.f32 %v75, %v286
    %v317 = vadd.f32 %v76, %v291
    %v318 = vadd.f32 %v77, %v294
    %v319 = vadd.f32 %v78, %v299
    %v320 = vadd.f32 %v79, %v302
    %321 = vst [vmem:[#allocation2] sm:$0xff] %v305
    %322 = vst [vmem:[#allocation2 + $0x8] sm:$0xff] %v306
    %323 = vst [vmem:[#allocation2 + $0x10] sm:$0xff] %v307
    %324 = vst [vmem:[#allocation2 + $0x18] sm:$0xff] %v308
    %325 = vst [vmem:[#allocation2 + $0x20] sm:$0xff] %v309
    %326 = vst [vmem:[#allocation2 + $0x28] sm:$0xff] %v310
    %327 = vst [vmem:[#allocation2 + $0x30] sm:$0xff] %v311
    %328 = vst [vmem:[#allocation2 + $0x38] sm:$0xff] %v312
    %329 = vst [vmem:[#allocation2 + $0x40] sm:$0xff] %v313
    %330 = vst [vmem:[#allocation2 + $0x48] sm:$0xff] %v314
    %331 = vst [vmem:[#allocation2 + $0x50] sm:$0xff] %v315
    %332 = vst [vmem:[#allocation2 + $0x58] sm:$0xff] %v316
    %333 = vst [vmem:[#allocation2 + $0x60] sm:$0xff] %v317
    %334 = vst [vmem:[#allocation2 + $0x68] sm:$0xff] %v318
    %335 = vst [vmem:[#allocation2 + $0x70] sm:$0xff] %v319
    %336 = vst [vmem:[#allocation2 + $0x78] sm:$0xff] %v320
    // Predicated region
    $region26: #{tpu_custom_call.1} parent=1 // pred_check
      %p337 = pneg %p44
    $region27: #{tpu_custom_call.1} parent=1 // pred_check_branch
      %339 = sbr.rel (%p337) target = $region29
    $region28: #{tpu_custom_call.1} parent=1 // pred_region
      %v340 = vld [vmem:[#allocation2] sm:$0xff]
      %v341 = vld [vmem:[#allocation2 + $0x8] sm:$0xff]
      %v342 = vld [vmem:[#allocation2 + $0x10] sm:$0xff]
      %v343 = vld [vmem:[#allocation2 + $0x18] sm:$0xff]
      %v344 = vld [vmem:[#allocation2 + $0x20] sm:$0xff]
      %v345 = vld [vmem:[#allocation2 + $0x28] sm:$0xff]
      %v346 = vld [vmem:[#allocation2 + $0x30] sm:$0xff]
      %v347 = vld [vmem:[#allocation2 + $0x38] sm:$0xff]
      %v348 = vld [vmem:[#allocation2 + $0x40] sm:$0xff]
      %v349 = vld [vmem:[#allocation2 + $0x48] sm:$0xff]
      %v350 = vld [vmem:[#allocation2 + $0x50] sm:$0xff]
      %v351 = vld [vmem:[#allocation2 + $0x58] sm:$0xff]
      %v352 = vld [vmem:[#allocation2 + $0x60] sm:$0xff]
      %v353 = vld [vmem:[#allocation2 + $0x68] sm:$0xff]
      %v354 = vld [vmem:[#allocation2 + $0x70] sm:$0xff]
      %v355 = vld [vmem:[#allocation2 + $0x78] sm:$0xff]
      %v356 = vld [vmem:[%s2] sm:$0x1]
      %v358 = vlaneseq
      %v359 = vshrl.u32 %v358, 7
      %v360 = vsub.s32 0, %v359
      %v361 = vrot.slane %v356, %v360
      %v363 = vadd.f32 %v340, %v361
      %v364 = vadd.f32 %v341, %v361
      %v365 = vadd.f32 %v342, %v361
      %v366 = vadd.f32 %v343, %v361
      %v367 = vadd.f32 %v344, %v361
      %v368 = vadd.f32 %v345, %v361
      %v369 = vadd.f32 %v346, %v361
      %v370 = vadd.f32 %v347, %v361
      %v371 = vadd.f32 %v348, %v361
      %v372 = vadd.f32 %v349, %v361
      %v373 = vadd.f32 %v350, %v361
      %v374 = vadd.f32 %v351, %v361
      %v375 = vadd.f32 %v352, %v361
      %v376 = vadd.f32 %v353, %v361
      %v377 = vadd.f32 %v354, %v361
      %v378 = vadd.f32 %v355, %v361
      %v379 = vpack.c.bf16 %v364, %v363
      %v380 = vpack.c.bf16 %v366, %v365
      %v381 = vpack.c.bf16 %v368, %v367
      %v382 = vpack.c.bf16 %v370, %v369
      %v383 = vpack.c.bf16 %v372, %v371
      %v384 = vpack.c.bf16 %v374, %v373
      %v385 = vpack.c.bf16 %v376, %v375
      %v386 = vpack.c.bf16 %v378, %v377
      %v395 = vunpack.c.l.b16 %v379
      %v396 = vunpack.c.h.b16 %v379
      %v397 = vunpack.c.l.b16 %v380
      %v398 = vunpack.c.h.b16 %v380
      %v399 = vunpack.c.l.b16 %v381
      %v400 = vunpack.c.h.b16 %v381
      %v401 = vunpack.c.l.b16 %v382
      %v402 = vunpack.c.h.b16 %v382
      %v403 = vunpack.c.l.b16 %v383
      %v404 = vunpack.c.h.b16 %v383
      %v405 = vunpack.c.l.b16 %v384
      %v406 = vunpack.c.h.b16 %v384
      %v407 = vunpack.c.l.b16 %v385
      %v408 = vunpack.c.h.b16 %v385
      %v409 = vunpack.c.l.b16 %v386
      %v410 = vunpack.c.h.b16 %v386
      %v411 = vpack.c.b16 %v395, %v395
      %v412 = vpack.c.b16 %v396, %v396
      %v413 = vpack.c.b16 %v397, %v397
      %v414 = vpack.c.b16 %v398, %v398
      %v415 = vpack.c.b16 %v399, %v399
      %v416 = vpack.c.b16 %v400, %v400
      %v417 = vpack.c.b16 %v401, %v401
      %v418 = vpack.c.b16 %v402, %v402
      %v419 = vpack.c.b16 %v403, %v403
      %v420 = vpack.c.b16 %v404, %v404
      %v421 = vpack.c.b16 %v405, %v405
      %v422 = vpack.c.b16 %v406, %v406
      %v423 = vpack.c.b16 %v407, %v407
      %v424 = vpack.c.b16 %v408, %v408
      %v425 = vpack.c.b16 %v409, %v409
      %v426 = vpack.c.b16 %v410, %v410
      %443 = vst [vmem:[#allocation8] sm:$0xf] %v411
      %444 = vst [vmem:[#allocation8 + $0x4] sm:$0xf] %v412
      %445 = vst [vmem:[#allocation8 + $0x8] sm:$0xf] %v413
      %446 = vst [vmem:[#allocation8 + $0xc] sm:$0xf] %v414
      %447 = vst [vmem:[#allocation8 + $0x10] sm:$0xf] %v415
      %448 = vst [vmem:[#allocation8 + $0x14] sm:$0xf] %v416
      %449 = vst [vmem:[#allocation8 + $0x18] sm:$0xf] %v417
      %450 = vst [vmem:[#allocation8 + $0x1c] sm:$0xf] %v418
      %451 = vst [vmem:[#allocation8 + $0x20] sm:$0xf] %v419
      %452 = vst [vmem:[#allocation8 + $0x24] sm:$0xf] %v420
      %453 = vst [vmem:[#allocation8 + $0x28] sm:$0xf] %v421
      %454 = vst [vmem:[#allocation8 + $0x2c] sm:$0xf] %v422
      %455 = vst [vmem:[#allocation8 + $0x30] sm:$0xf] %v423
      %456 = vst [vmem:[#allocation8 + $0x34] sm:$0xf] %v424
      %457 = vst [vmem:[#allocation8 + $0x38] sm:$0xf] %v425
      %458 = vst [vmem:[#allocation8 + $0x3c] sm:$0xf] %v426
    $region29: #{tpu_custom_call.1} parent=1 // pred_fallthru
      _
    // Predicated region
    $region30: #{tpu_custom_call.1} parent=1 // pred_check
      _
    $region31: #{tpu_custom_call.1} parent=1 // pred_check_branch
      %460 = sbr.rel (0) target = $region33
    $region32: #{tpu_custom_call.1} parent=1 // pred_region
      %s462 = ssub.s32 1024, 1024
      %463 = vsyncadd [#allocation5], %s462
      %s464 = sshll.u32 [#allocation8], 4
      %s465 = int_to_ptr.vmem [resolvable:$true] %s464
      %470 = dma.vmem_to_hbm [thread:$0]  %s465, 1024, %s3, [#allocation5], 64, 64, 4
    $region33: #{tpu_custom_call.1} parent=1 // pred_fallthru
      _
    // Predicated region
    $region34: #{tpu_custom_call.1} parent=1 // pred_check
      _
    $region35: #{tpu_custom_call.1} parent=1 // pred_check_branch
      %472 = sbr.rel (0) target = $region37
    $region36: #{tpu_custom_call.1} parent=1 // pred_region
      %473 = dma.done [#allocation5], 1024
    $region37: #{tpu_custom_call.1} parent=1 // pred_fallthru
      _
    %474 = vsyncpa [#allocation4], 1
    %475 = vsyncpa [#allocation7], 1
    %476 = vsyncpa [#allocation5], 1

</llo_original>
